<compile_context>
chip_gen: v5e
topology: v5e:2x2
jax: 0.10.0
libtpu: 0.0.40
codegen_flags: <defaults>
</compile_context>

<pallas_src>
import jax
import jax.numpy as jnp
from jax.experimental import pallas as pl
from jax.experimental.pallas import tpu as pltpu

D_IN, D_HID, D_OUT = 4, 3, 1
_SUB = 8                      # f32 sublanes per vreg
_LANES = 128                  # lanes per vreg
_ROW_ALIGN = _SUB * _LANES    # 1024: batch-tile alignment (tb//8 must be lane-aligned)


def mlp_kernel(w1_ref, b1_ref, w2_ref, b2_ref, xt_ref, ot_ref):
    """VPU-only MLP on a sublane-dense transposed layout.

    w1_ref (4,3), b1_ref (3,), w2_ref (3,1), b2_ref (1,): SMEM (scalar reads).
    xt_ref: (D_IN*8, tb//8) VMEM tile; rows [8k, 8k+8) hold feature k of tb batch rows.
    ot_ref: (8, tb//8) f32 VMEM tile (lane- and sublane-dense output store).
    """
    shp = ot_ref.shape                                         # (8, tb//8)
    # Widen once right after the load (no-op for f32, cheap bf16->f32 convert on v5e).
    x_all = xt_ref[...].astype(jnp.float32)                    # (32, tb//8)
    xs = [x_all[8 * k:8 * (k + 1), :] for k in range(D_IN)]    # sublane-aligned free slices
    y = jnp.full(shp, b2_ref[0], dtype=jnp.float32)            # fc2 bias
    for j in range(D_HID):                                     # unrolled at trace time
        h = jnp.full(shp, b1_ref[j], dtype=jnp.float32)        # fc1 bias, column j
        for k in range(D_IN):
            h = h + xs[k] * w1_ref[k, j]                       # scalar-broadcast MAC (VPU)
        h = jnp.maximum(h, 0.0)                                # fused ReLU
        y = y + h * w2_ref[j, 0]
    ot_ref[...] = y
    # TODO(synk): if a v7x profile still shows exposed DMA at step boundaries, add
    # pipeline_mode=pl.Buffered(3) on the x^T BlockSpec (only worth it after big tiles).


def _round_up(n, m):
    return ((n + m - 1) // m) * m


def simple_nn_forward(x, w1, b1, w2, b2, *, block_b=131072, input_dtype=jnp.float32):
    """x: (B, 4).  w1: (4,3)=fc1.weight.T, b1: (3,), w2: (3,1)=fc2.weight.T, b2: (1,).

    input_dtype=jnp.bfloat16 is an opt-in HBM-boundary cast (halves the dominant input
    stream); the default f32 matches the PyTorch module's numerics.
    """
    B = x.shape[0]
    # Batch tile: multiple of 1024 so tb//8 is lane-aligned; large to amortize per-step
    # overhead, capped so the grid keeps >=4 steps (>=2 per TensorCore on v7x) and so
    # double-buffered tiles fit comfortably in VMEM on all generations.
    tb = _round_up(min(block_b, max(B, 1)), _ROW_ALIGN)
    min_steps = 4
    if B >= min_steps * _ROW_ALIGN:
        tb = min(tb, _round_up(pl.cdiv(B, min_steps), _ROW_ALIGN))
    tb = min(tb, 512 * 1024)
    bp = _round_up(B, tb)          # padding waste is at most one tile (tile capped by B)
    tc = tb // _SUB                # lane extent of one tile
    cp = bp // _SUB                # lane extent of the padded batch

    # Single fused pre-pass: tail-only pad + transpose + row-major reshape -> (32, bp//8).
    # Row 8k+s, column c holds feature k of batch row s*(bp//8)+c.
    xt = jnp.pad(x.astype(input_dtype), ((0, bp - B), (0, 0))).T.reshape(D_IN * _SUB, cp)

    in_bytes = D_IN * tb * jnp.dtype(input_dtype).itemsize
    out_bytes = tb * 4
    smem = pl.BlockSpec(memory_space=pltpu.MemorySpace.SMEM)
    cost = pl.CostEstimate(
        flops=2 * B * (D_IN * D_HID + D_HID * D_OUT),
        transcendentals=0,
        bytes_accessed=bp * D_IN * jnp.dtype(input_dtype).itemsize + bp * 4
        + (D_IN * D_HID + D_HID + D_HID * D_OUT + D_OUT) * 4,
    )

    out_t = pl.pallas_call(
        mlp_kernel,
        out_shape=jax.ShapeDtypeStruct((_SUB, cp), jnp.float32),
        grid=(bp // tb,),
        in_specs=[
            smem,                                                  # w1
            smem,                                                  # b1
            smem,                                                  # w2
            smem,                                                  # b2
            pl.BlockSpec((D_IN * _SUB, tc), lambda i: (0, i)),     # x^T tile (sublane-dense)
        ],
        out_specs=pl.BlockSpec((_SUB, tc), lambda i: (0, i)),
        compiler_params=pltpu.CompilerParams(
            dimension_semantics=("parallel",),                     # shard batch across TCs (v7x)
            # Double-buffered in/out tiles + slack; 16 MiB floor is safe on v5e/v6e/v7x.
            vmem_limit_bytes=max(16 << 20, 2 * (in_bytes + out_bytes) + (2 << 20)),
        ),
        cost_estimate=cost,
    )(
        w1.astype(jnp.float32), b1.astype(jnp.float32),
        w2.astype(jnp.float32), b2.astype(jnp.float32), xt,
    )
    # Free epilogue: row-major reshape (8, bp//8) -> (bp,) restores batch order; tail slice.
    return out_t.reshape(bp)[:B, None]                             # (B, 1)


def reference_forward(x, w1, b1, w2, b2):
    h = jnp.maximum(x @ w1 + b1[None, :], 0.0)
    return h @ w2 + b2[None, :]


if __name__ == "__main__":
    key = jax.random.PRNGKey(0)
    kx, k1, kb1, k2, kb2 = jax.random.split(key, 5)

    # Deterministic synthetic parameters (shapes from SimpleNN.__init__), pre-transposed.
    w1 = jax.random.normal(k1, (D_IN, D_HID), dtype=jnp.float32) * 0.5   # fc1.weight.T
    b1 = jax.random.normal(kb1, (D_HID,), dtype=jnp.float32) * 0.1       # fc1.bias
    w2 = jax.random.normal(k2, (D_HID, D_OUT), dtype=jnp.float32) * 0.5  # fc2.weight.T
    b2 = jax.random.normal(kb2, (D_OUT,), dtype=jnp.float32) * 0.1       # fc2.bias

    # Small batch (single tile, single grid step).
    B = 2
    x = jax.random.normal(kx, (B, D_IN), dtype=jnp.float32)
    out = jax.block_until_ready(simple_nn_forward(x, w1, b1, w2, b2))
    ref = reference_forward(x, w1, b1, w2, b2)
    assert out.shape == (B, D_OUT), out.shape
    assert jnp.allclose(out, ref, atol=1e-5, rtol=1e-5), (out, ref)

    # Multi-step grid with a ragged (padded) tail batch.
    B2 = 3000
    x2 = jax.random.normal(kx, (B2, D_IN), dtype=jnp.float32)
    out2 = jax.block_until_ready(simple_nn_forward(x2, w1, b1, w2, b2, block_b=1024))
    ref2 = reference_forward(x2, w1, b1, w2, b2)
    assert out2.shape == (B2, D_OUT), out2.shape
    assert jnp.allclose(out2, ref2, atol=1e-5, rtol=1e-5)

    # Opt-in bf16 HBM-boundary cast (looser tolerance vs the f32 reference).
    out3 = jax.block_until_ready(
        simple_nn_forward(x2, w1, b1, w2, b2, block_b=1024, input_dtype=jnp.bfloat16))
    assert out3.shape == (B2, D_OUT), out3.shape
    assert jnp.allclose(out3, ref2, atol=5e-2, rtol=5e-2)

    print("KERNEL_OK")
</pallas_src>

<mosaic_0001>
module attributes {stable_mosaic.version = 11 : i64} {
  func.func @mlp_kernel(%arg0: i32, %arg1: memref<4x3xf32, #tpu.memory_space<smem>>, %arg2: memref<3xf32, #tpu.memory_space<smem>>, %arg3: memref<3x1xf32, #tpu.memory_space<smem>>, %arg4: memref<1xf32, #tpu.memory_space<smem>>, %arg5: memref<32x128xf32, #tpu.memory_space<vmem>>, %arg6: memref<8x128xf32, #tpu.memory_space<vmem>>) attributes {dimension_semantics = [#tpu.dimension_semantics<parallel>], iteration_bounds = array<i64: 1>, scalar_prefetch = 0 : i64, scratch_operands = 0 : i64, tpu.core_type = #tpu.core_type<tc>, window_params = [{transform_indices = @transform_0, window_bounds = array<i64: 4, 3>}, {transform_indices = @transform_1, window_bounds = array<i64: 3>}, {transform_indices = @transform_2, window_bounds = array<i64: 3, 1>}, {transform_indices = @transform_3, window_bounds = array<i64: 1>}, {transform_indices = @transform_4, window_bounds = array<i64: 32, 128>}, {transform_indices = @transform_5, window_bounds = array<i64: 8, 128>}]} {
    %c0 = arith.constant 0 : index
    %c0_0 = arith.constant 0 : index
    %0 = vector.load %arg5[%c0, %c0_0] : memref<32x128xf32, #tpu.memory_space<vmem>>, vector<32x128xf32>
    %1 = vector.extract_strided_slice %0 {offsets = [0, 0], sizes = [8, 128], strides = [1, 1]} : vector<32x128xf32> to vector<8x128xf32>
    %2 = vector.extract_strided_slice %0 {offsets = [8, 0], sizes = [8, 128], strides = [1, 1]} : vector<32x128xf32> to vector<8x128xf32>
    %3 = vector.extract_strided_slice %0 {offsets = [16, 0], sizes = [8, 128], strides = [1, 1]} : vector<32x128xf32> to vector<8x128xf32>
    %4 = vector.extract_strided_slice %0 {offsets = [24, 0], sizes = [8, 128], strides = [1, 1]} : vector<32x128xf32> to vector<8x128xf32>
    %c0_1 = arith.constant 0 : index
    %5 = memref.load %arg4[%c0_1] : memref<1xf32, #tpu.memory_space<smem>>
    %6 = vector.broadcast %5 : f32 to vector<8x128xf32>
    %c0_2 = arith.constant 0 : index
    %7 = memref.load %arg2[%c0_2] : memref<3xf32, #tpu.memory_space<smem>>
    %8 = vector.broadcast %7 : f32 to vector<8x128xf32>
    %c0_3 = arith.constant 0 : index
    %c0_4 = arith.constant 0 : index
    %9 = memref.load %arg1[%c0_3, %c0_4] : memref<4x3xf32, #tpu.memory_space<smem>>
    %10 = vector.broadcast %9 : f32 to vector<8x128xf32>
    %11 = arith.mulf %1, %10 : vector<8x128xf32>
    %12 = arith.addf %8, %11 : vector<8x128xf32>
    %c1 = arith.constant 1 : index
    %c0_5 = arith.constant 0 : index
    %13 = memref.load %arg1[%c1, %c0_5] : memref<4x3xf32, #tpu.memory_space<smem>>
    %14 = vector.broadcast %13 : f32 to vector<8x128xf32>
    %15 = arith.mulf %2, %14 : vector<8x128xf32>
    %16 = arith.addf %12, %15 : vector<8x128xf32>
    %c2 = arith.constant 2 : index
    %c0_6 = arith.constant 0 : index
    %17 = memref.load %arg1[%c2, %c0_6] : memref<4x3xf32, #tpu.memory_space<smem>>
    %18 = vector.broadcast %17 : f32 to vector<8x128xf32>
    %19 = arith.mulf %3, %18 : vector<8x128xf32>
    %20 = arith.addf %16, %19 : vector<8x128xf32>
    %c3 = arith.constant 3 : index
    %c0_7 = arith.constant 0 : index
    %21 = memref.load %arg1[%c3, %c0_7] : memref<4x3xf32, #tpu.memory_space<smem>>
    %22 = vector.broadcast %21 : f32 to vector<8x128xf32>
    %23 = arith.mulf %4, %22 : vector<8x128xf32>
    %24 = arith.addf %20, %23 : vector<8x128xf32>
    %cst = arith.constant 0.000000e+00 : f32
    %25 = vector.broadcast %cst : f32 to vector<8x128xf32>
    %26 = arith.maximumf %24, %25 : vector<8x128xf32>
    %c0_8 = arith.constant 0 : index
    %c0_9 = arith.constant 0 : index
    %27 = memref.load %arg3[%c0_8, %c0_9] : memref<3x1xf32, #tpu.memory_space<smem>>
    %28 = vector.broadcast %27 : f32 to vector<8x128xf32>
    %29 = arith.mulf %26, %28 : vector<8x128xf32>
    %30 = arith.addf %6, %29 : vector<8x128xf32>
    %c1_10 = arith.constant 1 : index
    %31 = memref.load %arg2[%c1_10] : memref<3xf32, #tpu.memory_space<smem>>
    %32 = vector.broadcast %31 : f32 to vector<8x128xf32>
    %c0_11 = arith.constant 0 : index
    %c1_12 = arith.constant 1 : index
    %33 = memref.load %arg1[%c0_11, %c1_12] : memref<4x3xf32, #tpu.memory_space<smem>>
    %34 = vector.broadcast %33 : f32 to vector<8x128xf32>
    %35 = arith.mulf %1, %34 : vector<8x128xf32>
    %36 = arith.addf %32, %35 : vector<8x128xf32>
    %c1_13 = arith.constant 1 : index
    %c1_14 = arith.constant 1 : index
    %37 = memref.load %arg1[%c1_13, %c1_14] : memref<4x3xf32, #tpu.memory_space<smem>>
    %38 = vector.broadcast %37 : f32 to vector<8x128xf32>
    %39 = arith.mulf %2, %38 : vector<8x128xf32>
    %40 = arith.addf %36, %39 : vector<8x128xf32>
    %c2_15 = arith.constant 2 : index
    %c1_16 = arith.constant 1 : index
    %41 = memref.load %arg1[%c2_15, %c1_16] : memref<4x3xf32, #tpu.memory_space<smem>>
    %42 = vector.broadcast %41 : f32 to vector<8x128xf32>
    %43 = arith.mulf %3, %42 : vector<8x128xf32>
    %44 = arith.addf %40, %43 : vector<8x128xf32>
    %c3_17 = arith.constant 3 : index
    %c1_18 = arith.constant 1 : index
    %45 = memref.load %arg1[%c3_17, %c1_18] : memref<4x3xf32, #tpu.memory_space<smem>>
    %46 = vector.broadcast %45 : f32 to vector<8x128xf32>
    %47 = arith.mulf %4, %46 : vector<8x128xf32>
    %48 = arith.addf %44, %47 : vector<8x128xf32>
    %cst_19 = arith.constant 0.000000e+00 : f32
    %49 = vector.broadcast %cst_19 : f32 to vector<8x128xf32>
    %50 = arith.maximumf %48, %49 : vector<8x128xf32>
    %c1_20 = arith.constant 1 : index
    %c0_21 = arith.constant 0 : index
    %51 = memref.load %arg3[%c1_20, %c0_21] : memref<3x1xf32, #tpu.memory_space<smem>>
    %52 = vector.broadcast %51 : f32 to vector<8x128xf32>
    %53 = arith.mulf %50, %52 : vector<8x128xf32>
    %54 = arith.addf %30, %53 : vector<8x128xf32>
    %c2_22 = arith.constant 2 : index
    %55 = memref.load %arg2[%c2_22] : memref<3xf32, #tpu.memory_space<smem>>
    %56 = vector.broadcast %55 : f32 to vector<8x128xf32>
    %c0_23 = arith.constant 0 : index
    %c2_24 = arith.constant 2 : index
    %57 = memref.load %arg1[%c0_23, %c2_24] : memref<4x3xf32, #tpu.memory_space<smem>>
    %58 = vector.broadcast %57 : f32 to vector<8x128xf32>
    %59 = arith.mulf %1, %58 : vector<8x128xf32>
    %60 = arith.addf %56, %59 : vector<8x128xf32>
    %c1_25 = arith.constant 1 : index
    %c2_26 = arith.constant 2 : index
    %61 = memref.load %arg1[%c1_25, %c2_26] : memref<4x3xf32, #tpu.memory_space<smem>>
    %62 = vector.broadcast %61 : f32 to vector<8x128xf32>
    %63 = arith.mulf %2, %62 : vector<8x128xf32>
    %64 = arith.addf %60, %63 : vector<8x128xf32>
    %c2_27 = arith.constant 2 : index
    %c2_28 = arith.constant 2 : index
    %65 = memref.load %arg1[%c2_27, %c2_28] : memref<4x3xf32, #tpu.memory_space<smem>>
    %66 = vector.broadcast %65 : f32 to vector<8x128xf32>
    %67 = arith.mulf %3, %66 : vector<8x128xf32>
    %68 = arith.addf %64, %67 : vector<8x128xf32>
    %c3_29 = arith.constant 3 : index
    %c2_30 = arith.constant 2 : index
    %69 = memref.load %arg1[%c3_29, %c2_30] : memref<4x3xf32, #tpu.memory_space<smem>>
    %70 = vector.broadcast %69 : f32 to vector<8x128xf32>
    %71 = arith.mulf %4, %70 : vector<8x128xf32>
    %72 = arith.addf %68, %71 : vector<8x128xf32>
    %cst_31 = arith.constant 0.000000e+00 : f32
    %73 = vector.broadcast %cst_31 : f32 to vector<8x128xf32>
    %74 = arith.maximumf %72, %73 : vector<8x128xf32>
    %c2_32 = arith.constant 2 : index
    %c0_33 = arith.constant 0 : index
    %75 = memref.load %arg3[%c2_32, %c0_33] : memref<3x1xf32, #tpu.memory_space<smem>>
    %76 = vector.broadcast %75 : f32 to vector<8x128xf32>
    %77 = arith.mulf %74, %76 : vector<8x128xf32>
    %78 = arith.addf %54, %77 : vector<8x128xf32>
    %c0_34 = arith.constant 0 : index
    %c0_35 = arith.constant 0 : index
    %79 = vector.load %arg6[%c0_34, %c0_35] : memref<8x128xf32, #tpu.memory_space<vmem>>, vector<8x128xf32>
    tpu.vector_store %arg6[%c0_34, %c0_35], %78 {strides = array<i32>} : memref<8x128xf32, #tpu.memory_space<vmem>>, vector<8x128xf32>,
    return
  }
  func.func @transform_0(%arg0: i32) -> (i32, i32) {
    %c0_i32 = arith.constant 0 : i32
    %c0_i32_0 = arith.constant 0 : i32
    %c0_i32_1 = arith.constant 0 : i32
    return %c0_i32, %c0_i32_0 : i32, i32
  }
  func.func @transform_1(%arg0: i32) -> i32 {
    %c0_i32 = arith.constant 0 : i32
    %c0_i32_0 = arith.constant 0 : i32
    return %c0_i32 : i32
  }
  func.func @transform_2(%arg0: i32) -> (i32, i32) {
    %c0_i32 = arith.constant 0 : i32
    %c0_i32_0 = arith.constant 0 : i32
    %c0_i32_1 = arith.constant 0 : i32
    return %c0_i32, %c0_i32_0 : i32, i32
  }
  func.func @transform_3(%arg0: i32) -> i32 {
    %c0_i32 = arith.constant 0 : i32
    %c0_i32_0 = arith.constant 0 : i32
    return %c0_i32 : i32
  }
  func.func @transform_4(%arg0: i32) -> (i32, i32) {
    %c0_i32 = arith.constant 0 : i32
    %c0_i32_0 = arith.constant 0 : i32
    return %c0_i32, %arg0 : i32, i32
  }
  func.func @transform_5(%arg0: i32) -> (i32, i32) {
    %c0_i32 = arith.constant 0 : i32
    %c0_i32_0 = arith.constant 0 : i32
    return %c0_i32, %arg0 : i32, i32
  }
}

</mosaic_0001>

<llo_original>
// kernel: tpu_custom_call.1
$region0: #{tpu_custom_call.1}
  #allocation0 [shape = 'u32[]', space=smem, size = 0x4, offset = 0x4, fixed_abs, tag = 'smem constant byte address 0x4 - core index']
  #allocation1 [shape = 'u32[72,128]{1,0:T(1,128)}', space=vmem, size = 0x9000, scoped, tag = 'internal scratch']
  #allocation2 [shape = 'f32[1]{0:T(128)S(6)}', space=smem, size = 0x200, scoped, tag = 'scoped memory for tpu_custom_call.1']
  %s0 = inlined_call_operand.vmem [shape: f32[4,3], index: 0, kind: input, shape index: {}]
  %s1 = inlined_call_operand.vmem [shape: f32[3], index: 1, kind: input, shape index: {}]
  %s2 = inlined_call_operand.vmem [shape: f32[3,1], index: 2, kind: input, shape index: {}]
  %s3 = inlined_call_operand.<no memory space> [shape: f32[1], index: 3, kind: input, shape index: {}]
  %s4 = inlined_call_operand.hbm [shape: f32[32,128], index: 4, kind: input, shape index: {}]
  %s5 = inlined_call_operand.hbm [shape: f32[8,128], index: 5, kind: output, shape index: {}]
  %s6 = sld [smem:[#allocation0]]
  $region46: #{tpu_custom_call.1} parent=0
    _
  %s8 = ssub.s32 1, %s6
  %s9 = scalar_select 0, %s8, %s6
  %10 = sst [smem:[#allocation2]] %s3
  $region1: #{tpu_custom_call.1} parent=0
    #allocation3 [shape = 'u8[2048]{0}', space=smem, size = 0x800, scoped, tag = 'input window, operand 0, single buffered']
    #allocation4 [shape = 's32[1]{0}', space=sflag, size = 0x4, scoped, tag = 'scoped memory for tpu_custom_call.1']
    #allocation5 [shape = 's32[1]{0}', space=sflag, size = 0x4, scoped, tag = 'scoped memory for tpu_custom_call.1']
    #allocation6 [shape = 's32[1]{0}', space=sflag, size = 0x4, scoped, tag = 'scoped memory for tpu_custom_call.1']
    #allocation7 [shape = 'u8[512]{0}', space=smem, size = 0x200, scoped, tag = 'input window, operand 1, single buffered']
    #allocation8 [shape = 's32[1]{0}', space=sflag, size = 0x4, scoped, tag = 'scoped memory for tpu_custom_call.1']
    #allocation9 [shape = 'u8[2048]{0}', space=smem, size = 0x800, scoped, tag = 'input window, operand 2, single buffered']
    #allocation10 [shape = 'u8[16384]{0}', space=vmem, size = 0x4000, scoped, tag = 'input window, operand 4, single buffered']
    #allocation11 [shape = 'u8[4096]{0}', space=vmem, size = 0x1000, scoped, tag = 'output window, operand 0, single buffered']
    %11 = vsyncpa [#allocation6], 0
    %12 = vsyncpa [#allocation8], 0
    %13 = vsyncpa [#allocation4], 0
    %14 = vsyncpa [#allocation5], 0
    // Predicated region
    $region2: #{tpu_custom_call.1} parent=1 // pred_check
      _
    $region3: #{tpu_custom_call.1} parent=1 // pred_check_branch
      %16 = sbr.rel (0) target = $region5
    $region4: #{tpu_custom_call.1} parent=1 // pred_region
      %18 = vsyncadd [#allocation6], 0
      %s20 = sshll.u32 %s0, 4
      %s21 = int_to_ptr.vmem [resolvable:$true] %s20
      %23 = dma.vmem_to_smem %s21, 64, [#allocation3], [#allocation6]
    $region5: #{tpu_custom_call.1} parent=1 // pred_fallthru
      _
    // Predicated region
    $region6: #{tpu_custom_call.1} parent=1 // pred_check
      _
    $region7: #{tpu_custom_call.1} parent=1 // pred_check_branch
      %25 = sbr.rel (0) target = $region9
    $region8: #{tpu_custom_call.1} parent=1 // pred_region
      %27 = vsyncadd [#allocation8], 0
      %s29 = sshll.u32 %s1, 4
      %s30 = int_to_ptr.vmem [resolvable:$true] %s29
      %32 = dma.vmem_to_smem %s30, 16, [#allocation7], [#allocation8]
    $region9: #{tpu_custom_call.1} parent=1 // pred_fallthru
      _
    // Predicated region
    $region10: #{tpu_custom_call.1} parent=1 // pred_check
      _
    $region11: #{tpu_custom_call.1} parent=1 // pred_check_branch
      %34 = sbr.rel (0) target = $region13
    $region12: #{tpu_custom_call.1} parent=1 // pred_region
      %36 = vsyncadd [#allocation8], 0
      %s38 = sshll.u32 %s2, 4
      %s39 = int_to_ptr.vmem [resolvable:$true] %s38
      %41 = dma.vmem_to_smem %s39, 64, [#allocation9], [#allocation8]
    $region13: #{tpu_custom_call.1} parent=1 // pred_fallthru
      _
    // Predicated region
    $region14: #{tpu_custom_call.1} parent=1 // pred_check
      _
    $region15: #{tpu_custom_call.1} parent=1 // pred_check_branch
      %43 = sbr.rel (0) target = $region17
    $region16: #{tpu_custom_call.1} parent=1 // pred_region
      _
    $region17: #{tpu_custom_call.1} parent=1 // pred_fallthru
      _
    // Predicated region
    $region18: #{tpu_custom_call.1} parent=1 // pred_check
      _
    $region19: #{tpu_custom_call.1} parent=1 // pred_check_branch
      %45 = sbr.rel (0) target = $region21
    $region20: #{tpu_custom_call.1} parent=1 // pred_region
      %47 = vsyncadd [#allocation4], 0
      %s48 = sshll.u32 %s4, 4
      %s49 = int_to_ptr.hbm [resolvable:$true] %s48
      %s50 = sshll.u32 [#allocation10], 4
      %s51 = int_to_ptr.vmem [resolvable:$true] %s50
      %56 = dma.hbm_to_vmem [thread:$0]  %s49, 512, %s51, [#allocation4], 128, 128, 8
    $region21: #{tpu_custom_call.1} parent=1 // pred_fallthru
      _
    // Predicated region
    $region22: #{tpu_custom_call.1} parent=1 // pred_check
      _
    $region23: #{tpu_custom_call.1} parent=1 // pred_check_branch
      %58 = sbr.rel (0) target = $region25
    $region24: #{tpu_custom_call.1} parent=1 // pred_region
      %60 = dma.done [#allocation6], 64
    $region25: #{tpu_custom_call.1} parent=1 // pred_fallthru
      _
    // Predicated region
    $region26: #{tpu_custom_call.1} parent=1 // pred_check
      _
    $region27: #{tpu_custom_call.1} parent=1 // pred_check_branch
      %62 = sbr.rel (0) target = $region29
    $region28: #{tpu_custom_call.1} parent=1 // pred_region
      %64 = dma.done [#allocation8], 16
    $region29: #{tpu_custom_call.1} parent=1 // pred_fallthru
      _
    // Predicated region
    $region30: #{tpu_custom_call.1} parent=1 // pred_check
      _
    $region31: #{tpu_custom_call.1} parent=1 // pred_check_branch
      %66 = sbr.rel (0) target = $region33
    $region32: #{tpu_custom_call.1} parent=1 // pred_region
      %68 = dma.done [#allocation8], 64
    $region33: #{tpu_custom_call.1} parent=1 // pred_fallthru
      _
    // Predicated region
    $region34: #{tpu_custom_call.1} parent=1 // pred_check
      _
    $region35: #{tpu_custom_call.1} parent=1 // pred_check_branch
      %70 = sbr.rel (0) target = $region37
    $region36: #{tpu_custom_call.1} parent=1 // pred_region
      %72 = dma.done [#allocation4], 512
    $region37: #{tpu_custom_call.1} parent=1 // pred_fallthru
      _
    %73 = sfence
    %v74 = vld [vmem:[#allocation10] sm:$0xff]
    %v75 = vld [vmem:[#allocation10 + $0x8] sm:$0xff]
    %v76 = vld [vmem:[#allocation10 + $0x10] sm:$0xff]
    %v77 = vld [vmem:[#allocation10 + $0x18] sm:$0xff]
    %s78 = sld [smem:[#allocation2]]
    %v79 = vstv %s78
    %s80 = sld [smem:[#allocation7]]
    %v81 = vstv %s80
    %s82 = sld [smem:[#allocation3]]
    %v83 = vstv %s82
    %v84 = vmul.f32 %v74, %v83
    %v85 = vadd.f32 %v81, %v84
    %s86 = sld [smem:[#allocation3 + $0x80]]
    %v87 = vstv %s86
    %v88 = vmul.f32 %v75, %v87
    %v89 = vadd.f32 %v85, %v88
    %s90 = sld [smem:[#allocation3 + $0x100]]
    %v91 = vstv %s90
    %v92 = vmul.f32 %v76, %v91
    %v93 = vadd.f32 %v89, %v92
    %s94 = sld [smem:[#allocation3 + $0x180]]
    %v95 = vstv %s94
    %v96 = vmul.f32 %v77, %v95
    %v97 = vadd.f32 %v93, %v96
    %v98 = vmax.f32 %v97, 0.0
    %s99 = sld [smem:[#allocation9]]
    %v100 = vstv %s99
    %v101 = vmul.f32 %v98, %v100
    %v102 = vadd.f32 %v79, %v101
    %s103 = sld [smem:[#allocation7 + $0x1]]
    %v104 = vstv %s103
    %s105 = sld [smem:[#allocation3 + $0x1]]
    %v106 = vstv %s105
    %v107 = vmul.f32 %v74, %v106
    %v108 = vadd.f32 %v104, %v107
    %s109 = sld [smem:[#allocation3 + $0x81]]
    %v110 = vstv %s109
    %v111 = vmul.f32 %v75, %v110
    %v112 = vadd.f32 %v108, %v111
    %s113 = sld [smem:[#allocation3 + $0x101]]
    %v114 = vstv %s113
    %v115 = vmul.f32 %v76, %v114
    %v116 = vadd.f32 %v112, %v115
    %s117 = sld [smem:[#allocation3 + $0x181]]
    %v118 = vstv %s117
    %v119 = vmul.f32 %v77, %v118
    %v120 = vadd.f32 %v116, %v119
    %v121 = vmax.f32 %v120, 0.0
    %s122 = sld [smem:[#allocation9 + $0x80]]
    %v123 = vstv %s122
    %v124 = vmul.f32 %v121, %v123
    %v125 = vadd.f32 %v102, %v124
    %s126 = sld [smem:[#allocation7 + $0x2]]
    %v127 = vstv %s126
    %s128 = sld [smem:[#allocation3 + $0x2]]
    %v129 = vstv %s128
    %v130 = vmul.f32 %v74, %v129
    %v131 = vadd.f32 %v127, %v130
    %s132 = sld [smem:[#allocation3 + $0x82]]
    %v133 = vstv %s132
    %v134 = vmul.f32 %v75, %v133
    %v135 = vadd.f32 %v131, %v134
    %s136 = sld [smem:[#allocation3 + $0x102]]
    %v137 = vstv %s136
    %v138 = vmul.f32 %v76, %v137
    %v139 = vadd.f32 %v135, %v138
    %s140 = sld [smem:[#allocation3 + $0x182]]
    %v141 = vstv %s140
    %v142 = vmul.f32 %v77, %v141
    %v143 = vadd.f32 %v139, %v142
    %v144 = vmax.f32 %v143, 0.0
    %s145 = sld [smem:[#allocation9 + $0x100]]
    %v146 = vstv %s145
    %v147 = vmul.f32 %v144, %v146
    %v148 = vadd.f32 %v125, %v147
    %149 = vst [vmem:[#allocation11] sm:$0xff] %v148
    // Predicated region
    $region38: #{tpu_custom_call.1} parent=1 // pred_check
      _
    $region39: #{tpu_custom_call.1} parent=1 // pred_check_branch
      %151 = sbr.rel (0) target = $region41
    $region40: #{tpu_custom_call.1} parent=1 // pred_region
      %153 = vsyncadd [#allocation5], 0
      %s155 = sshll.u32 [#allocation11], 4
      %s156 = int_to_ptr.vmem [resolvable:$true] %s155
      %s157 = sshll.u32 %s5, 4
      %s158 = int_to_ptr.hbm [resolvable:$true] %s157
      %160 = dma.vmem_to_hbm [thread:$0]  %s156, 128, %s158, [#allocation5]
    $region41: #{tpu_custom_call.1} parent=1 // pred_fallthru
      _
    // Predicated region
    $region42: #{tpu_custom_call.1} parent=1 // pred_check
      _
    $region43: #{tpu_custom_call.1} parent=1 // pred_check_branch
      %162 = sbr.rel (0) target = $region45
    $region44: #{tpu_custom_call.1} parent=1 // pred_region
      %164 = dma.done [#allocation5], 128
    $region45: #{tpu_custom_call.1} parent=1 // pred_fallthru
      _
    %165 = vsyncpa [#allocation4], 1
    %166 = vsyncpa [#allocation5], 1
    %167 = vsyncpa [#allocation6], 1
    %168 = vsyncpa [#allocation8], 1

</llo_original>
